<compile_context>
chip_gen: v7x
topology: tpu7x:2x2x1
jax: 0.10.0
libtpu: 0.0.40
codegen_flags: <defaults>
</compile_context>

<pallas_src>
import functools

import jax
import jax.numpy as jnp
from jax.experimental import pallas as pl
from jax.experimental.pallas import tpu as pltpu


def _fused_decoder_kernel(x_ref, *refs, num_layers: int):
    """Fused MLP: [Linear+ReLU]*(num_layers-1) -> Linear -> sigmoid.

    refs = (w_0, b_0, w_1, b_1, ..., w_{L-1}, b_{L-1}, o_ref).
    Weights arrive in bf16; accumulation and elementwise math are f32.
    Intermediates never leave VMEM/vregs; only the final lane-dense
    (TB, n_out) tile is written.
    """
    o_ref = refs[-1]
    wb = refs[:-1]

    h = x_ref[...].astype(jnp.float32)
    for i in range(num_layers):
        w = wb[2 * i][...]                                   # bf16 (In, Out)
        b = wb[2 * i + 1][...].astype(jnp.float32)           # (1, Out) broadcast
        # bf16 x bf16 on the MXU, f32 accumulation.
        h = jnp.dot(h.astype(jnp.bfloat16), w,
                    preferred_element_type=jnp.float32) + b
        if i < num_layers - 1:
            h = jnp.maximum(h, 0.0)                           # ReLU (VPU)
        else:
            # sigmoid(x) = 1 / (1 + exp(-x)); exp and approx reciprocal both
            # ride the EUP slot, keeping the VALU free.
            e = jnp.exp(-h)
            h = pl.reciprocal(1.0 + e, approx=True)
    o_ref[...] = h.astype(o_ref.dtype)


def decoder_forward(z: jax.Array, params, mu_params, *,
                    block_b: int = 2048, out_dtype=None) -> jax.Array:
    """Forward pass of the VAE decoder as one fused Pallas kernel.

    params:    list of (w, b) for hidden Linear+ReLU layers, w: (d1, d2), b: (1, d2)
    mu_params: (w_mu, b_mu) for the final Linear+sigmoid layer
    """
    all_wb = list(params) + [mu_params]
    num_layers = len(all_wb)
    B, n_latent = z.shape
    n_out = all_wb[-1][0].shape[1]
    out_dtype = z.dtype if out_dtype is None else out_dtype

    # ---- batch tile: multiple of 8 (sublane). Big tiles amortize per-step
    # overhead; ensure >= 2 grid steps when B permits so v7x's 2 TensorCores
    # both get work.
    tb = max(8, min(block_b, B))
    tb = (tb // 8) * 8
    if B > 8 and tb >= B:
        half = -(-B // 2)                       # ceil(B / 2)
        tb = max(8, ((half + 7) // 8) * 8)
        if tb >= B:                             # can't split into 2 full tiles
            tb = max(8, tb - 8)
    grid = (pl.cdiv(B, tb),)                    # ragged last tile handled by Pallas

    # ---- cast weights once to bf16 (model params; in production store bf16).
    wb_cast = [(w.astype(jnp.bfloat16), b.astype(jnp.float32)) for w, b in all_wb]

    # ---- specs: activations blocked over batch, weights/biases VMEM-resident
    # (constant index_map -> same full-extent block every grid step).
    flat_inputs = [z]
    in_specs = [pl.BlockSpec((tb, n_latent), lambda i: (i, 0))]
    for w, b in wb_cast:
        d1, d2 = w.shape
        assert b.shape == (1, d2)
        flat_inputs += [w, b]
        in_specs += [
            pl.BlockSpec((d1, d2), lambda i: (0, 0)),
            pl.BlockSpec((1, d2), lambda i: (0, 0)),
        ]
    out_spec = pl.BlockSpec((tb, n_out), lambda i: (i, 0))

    # ---- advisory cost estimate for the XLA scheduler.
    flops = 0
    bytes_accessed = z.size * z.dtype.itemsize + B * n_out * jnp.dtype(out_dtype).itemsize
    for w, b in wb_cast:
        d1, d2 = w.shape
        flops += 2 * B * d1 * d2 + B * d2
        bytes_accessed += w.size * 2 + b.size * 4
    transcendentals = 2 * B * n_out             # exp + approx reciprocal

    # ---- VMEM budget: resident params + double-buffered in/out tiles + slack,
    # capped at 48 MiB to leave headroom on v7x (64 MiB physical per TC).
    max_width = max([n_latent] + [w.shape[1] for w, _ in wb_cast])
    needed = (
        sum(w.size * 2 + b.size * 4 for w, b in wb_cast)
        + 2 * tb * n_latent * z.dtype.itemsize          # double-buffered input tile
        + 2 * tb * n_out * jnp.dtype(out_dtype).itemsize  # double-buffered output tile
        + 4 * tb * max_width * 4                        # f32 intermediates / headroom
    )
    vmem_limit = int(min(max(2 * needed, 4 << 20), 48 << 20))

    kernel = functools.partial(_fused_decoder_kernel, num_layers=num_layers)
    out = pl.pallas_call(
        kernel,
        out_shape=jax.ShapeDtypeStruct((B, n_out), out_dtype),
        grid_spec=pl.GridSpec(
            grid=grid,
            in_specs=in_specs,
            out_specs=out_spec,
        ),
        compiler_params=pltpu.CompilerParams(
            dimension_semantics=("parallel",),
            vmem_limit_bytes=vmem_limit,
        ),
        cost_estimate=pl.CostEstimate(
            flops=flops,
            transcendentals=transcendentals,
            bytes_accessed=bytes_accessed,
        ),
    )(*flat_inputs)
    return out


def init_decoder_params(key, n_latent: int, n_out: int, layer_dims):
    """Deterministic init mirroring nn.Linear's default U(-1/sqrt(fan_in), ...)."""
    dims = (n_latent,) + tuple(layer_dims)
    params = []
    for d1, d2 in zip(dims[:-1], dims[1:]):
        key, kw, kb = jax.random.split(key, 3)
        bound = 1.0 / jnp.sqrt(d1)
        w = jax.random.uniform(kw, (d1, d2), jnp.float32, -bound, bound)
        b = jax.random.uniform(kb, (1, d2), jnp.float32, -bound, bound)
        params.append((w, b))
    key, kw, kb = jax.random.split(key, 3)
    bound = 1.0 / jnp.sqrt(dims[-1])
    w_mu = jax.random.uniform(kw, (dims[-1], n_out), jnp.float32, -bound, bound)
    b_mu = jax.random.uniform(kb, (1, n_out), jnp.float32, -bound, bound)
    return params, (w_mu, b_mu)


def _reference_forward(z, params, mu_params):
    """Pure-JAX reference mirroring the kernel's bf16-matmul / f32-accumulate math."""
    def bf16_round(x):
        return x.astype(jnp.bfloat16).astype(jnp.float32)

    h = z.astype(jnp.float32)
    for w, b in params:
        h = jnp.maximum(bf16_round(h) @ bf16_round(w) + b, 0.0)
    w_mu, b_mu = mu_params
    h = bf16_round(h) @ bf16_round(w_mu) + b_mu
    return jax.nn.sigmoid(h)


if __name__ == "__main__":
    # Small shapes consistent with the module; batch chosen so the kernel
    # exercises >= 2 grid steps (tb=16) and a ragged last tile.
    batch = 24
    n_latent = 16
    layer_dims = (32, 64)
    n_out = 128

    key = jax.random.PRNGKey(0)
    key, kz = jax.random.split(key)
    z = jax.random.normal(kz, (batch, n_latent), jnp.float32)

    params, mu_params = init_decoder_params(key, n_latent, n_out, layer_dims)

    out = decoder_forward(z, params, mu_params)
    out = jax.block_until_ready(out)

    ref = _reference_forward(z, params, mu_params)

    assert out.shape == (batch, n_out), out.shape
    assert bool(jnp.all(jnp.isfinite(out))), "non-finite output"
    assert jnp.allclose(out, ref, atol=2e-3, rtol=2e-3), "mismatch vs reference"
    print("KERNEL_OK")
</pallas_src>

<mosaic_0001>
module attributes {stable_mosaic.version = 11 : i64} {
  func.func @_fused_decoder_kernel(%arg0: i32, %arg1: memref<16x16xf32, #tpu.memory_space<vmem>>, %arg2: memref<16x32xbf16, #tpu.memory_space<vmem>>, %arg3: memref<1x32xf32, #tpu.memory_space<vmem>>, %arg4: memref<32x64xbf16, #tpu.memory_space<vmem>>, %arg5: memref<1x64xf32, #tpu.memory_space<vmem>>, %arg6: memref<64x128xbf16, #tpu.memory_space<vmem>>, %arg7: memref<1x128xf32, #tpu.memory_space<vmem>>, %arg8: memref<16x128xf32, #tpu.memory_space<vmem>>) attributes {dimension_semantics = [#tpu.dimension_semantics<parallel>], iteration_bounds = array<i64: 2>, scalar_prefetch = 0 : i64, scratch_operands = 0 : i64, tpu.core_type = #tpu.core_type<tc>, window_params = [{transform_indices = @transform_0, window_bounds = array<i64: 16, 16>}, {pipeline_mode = #tpu.pipeline_mode<synchronous>, transform_indices = @transform_1, window_bounds = array<i64: 16, 32>}, {pipeline_mode = #tpu.pipeline_mode<synchronous>, transform_indices = @transform_2, window_bounds = array<i64: 1, 32>}, {pipeline_mode = #tpu.pipeline_mode<synchronous>, transform_indices = @transform_3, window_bounds = array<i64: 32, 64>}, {pipeline_mode = #tpu.pipeline_mode<synchronous>, transform_indices = @transform_4, window_bounds = array<i64: 1, 64>}, {pipeline_mode = #tpu.pipeline_mode<synchronous>, transform_indices = @transform_5, window_bounds = array<i64: 64, 128>}, {pipeline_mode = #tpu.pipeline_mode<synchronous>, transform_indices = @transform_6, window_bounds = array<i64: 1, 128>}, {transform_indices = @transform_7, window_bounds = array<i64: 16, 128>}]} {
    %c0 = arith.constant 0 : index
    %c0_0 = arith.constant 0 : index
    %0 = vector.load %arg1[%c0, %c0_0] : memref<16x16xf32, #tpu.memory_space<vmem>>, vector<16x16xf32>
    %c0_1 = arith.constant 0 : index
    %c0_2 = arith.constant 0 : index
    %1 = vector.load %arg2[%c0_1, %c0_2] : memref<16x32xbf16, #tpu.memory_space<vmem>>, vector<16x32xbf16>
    %c0_3 = arith.constant 0 : index
    %c0_4 = arith.constant 0 : index
    %2 = vector.load %arg3[%c0_3, %c0_4] : memref<1x32xf32, #tpu.memory_space<vmem>>, vector<1x32xf32>
    %3 = arith.truncf %0 : vector<16x16xf32> to vector<16x16xbf16>
    %cst = arith.constant dense<0.000000e+00> : vector<16x32xf32>
    %4 = tpu.matmul %3, %1, %cst {dimension_numbers = #tpu.dot_dimension_numbers<[1], [0], [0], [1], [0, 0, 1, 1], [], []>} : vector<16x16xbf16>, vector<16x32xbf16>, vector<16x32xf32> -> vector<16x32xf32>
    %5 = vector.broadcast %2 : vector<1x32xf32> to vector<16x32xf32>
    %6 = arith.addf %4, %5 : vector<16x32xf32>
    %cst_5 = arith.constant 0.000000e+00 : f32
    %7 = vector.broadcast %cst_5 : f32 to vector<16x32xf32>
    %8 = arith.maximumf %6, %7 : vector<16x32xf32>
    %c0_6 = arith.constant 0 : index
    %c0_7 = arith.constant 0 : index
    %9 = vector.load %arg4[%c0_6, %c0_7] : memref<32x64xbf16, #tpu.memory_space<vmem>>, vector<32x64xbf16>
    %c0_8 = arith.constant 0 : index
    %c0_9 = arith.constant 0 : index
    %10 = vector.load %arg5[%c0_8, %c0_9] : memref<1x64xf32, #tpu.memory_space<vmem>>, vector<1x64xf32>
    %11 = arith.truncf %8 : vector<16x32xf32> to vector<16x32xbf16>
    %cst_10 = arith.constant dense<0.000000e+00> : vector<16x64xf32>
    %12 = tpu.matmul %11, %9, %cst_10 {dimension_numbers = #tpu.dot_dimension_numbers<[1], [0], [0], [1], [0, 0, 1, 1], [], []>} : vector<16x32xbf16>, vector<32x64xbf16>, vector<16x64xf32> -> vector<16x64xf32>
    %13 = vector.broadcast %10 : vector<1x64xf32> to vector<16x64xf32>
    %14 = arith.addf %12, %13 : vector<16x64xf32>
    %cst_11 = arith.constant 0.000000e+00 : f32
    %15 = vector.broadcast %cst_11 : f32 to vector<16x64xf32>
    %16 = arith.maximumf %14, %15 : vector<16x64xf32>
    %c0_12 = arith.constant 0 : index
    %c0_13 = arith.constant 0 : index
    %17 = vector.load %arg6[%c0_12, %c0_13] : memref<64x128xbf16, #tpu.memory_space<vmem>>, vector<64x128xbf16>
    %c0_14 = arith.constant 0 : index
    %c0_15 = arith.constant 0 : index
    %18 = vector.load %arg7[%c0_14, %c0_15] : memref<1x128xf32, #tpu.memory_space<vmem>>, vector<1x128xf32>
    %19 = arith.truncf %16 : vector<16x64xf32> to vector<16x64xbf16>
    %cst_16 = arith.constant dense<0.000000e+00> : vector<16x128xf32>
    %20 = tpu.matmul %19, %17, %cst_16 {dimension_numbers = #tpu.dot_dimension_numbers<[1], [0], [0], [1], [0, 0, 1, 1], [], []>} : vector<16x64xbf16>, vector<64x128xbf16>, vector<16x128xf32> -> vector<16x128xf32>
    %21 = vector.broadcast %18 : vector<1x128xf32> to vector<16x128xf32>
    %22 = arith.addf %20, %21 : vector<16x128xf32>
    %cst_17 = arith.constant 0.000000e+00 : f32
    %23 = vector.broadcast %cst_17 : f32 to vector<16x128xf32>
    %24 = arith.subf %23, %22 : vector<16x128xf32>
    %25 = math.exp %24 : vector<16x128xf32>
    %cst_18 = arith.constant 1.000000e+00 : f32
    %26 = vector.broadcast %cst_18 : f32 to vector<16x128xf32>
    %27 = arith.addf %26, %25 : vector<16x128xf32>
    %28 = tpu.reciprocal %27 {approx = true} : vector<16x128xf32> -> vector<16x128xf32>
    %c0_19 = arith.constant 0 : index
    %c0_20 = arith.constant 0 : index
    %29 = vector.load %arg8[%c0_19, %c0_20] : memref<16x128xf32, #tpu.memory_space<vmem>>, vector<16x128xf32>
    tpu.vector_store %arg8[%c0_19, %c0_20], %28 {strides = array<i32>} : memref<16x128xf32, #tpu.memory_space<vmem>>, vector<16x128xf32>,
    return
  }
  func.func @transform_0(%arg0: i32) -> (i32, i32) {
    %c0_i32 = arith.constant 0 : i32
    %c0_i32_0 = arith.constant 0 : i32
    return %arg0, %c0_i32 : i32, i32
  }
  func.func @transform_1(%arg0: i32) -> (i32, i32) {
    %c0_i32 = arith.constant 0 : i32
    %c0_i32_0 = arith.constant 0 : i32
    %c0_i32_1 = arith.constant 0 : i32
    return %c0_i32, %c0_i32_0 : i32, i32
  }
  func.func @transform_2(%arg0: i32) -> (i32, i32) {
    %c0_i32 = arith.constant 0 : i32
    %c0_i32_0 = arith.constant 0 : i32
    %c0_i32_1 = arith.constant 0 : i32
    return %c0_i32, %c0_i32_0 : i32, i32
  }
  func.func @transform_3(%arg0: i32) -> (i32, i32) {
    %c0_i32 = arith.constant 0 : i32
    %c0_i32_0 = arith.constant 0 : i32
    %c0_i32_1 = arith.constant 0 : i32
    return %c0_i32, %c0_i32_0 : i32, i32
  }
  func.func @transform_4(%arg0: i32) -> (i32, i32) {
    %c0_i32 = arith.constant 0 : i32
    %c0_i32_0 = arith.constant 0 : i32
    %c0_i32_1 = arith.constant 0 : i32
    return %c0_i32, %c0_i32_0 : i32, i32
  }
  func.func @transform_5(%arg0: i32) -> (i32, i32) {
    %c0_i32 = arith.constant 0 : i32
    %c0_i32_0 = arith.constant 0 : i32
    %c0_i32_1 = arith.constant 0 : i32
    return %c0_i32, %c0_i32_0 : i32, i32
  }
  func.func @transform_6(%arg0: i32) -> (i32, i32) {
    %c0_i32 = arith.constant 0 : i32
    %c0_i32_0 = arith.constant 0 : i32
    %c0_i32_1 = arith.constant 0 : i32
    return %c0_i32, %c0_i32_0 : i32, i32
  }
  func.func @transform_7(%arg0: i32) -> (i32, i32) {
    %c0_i32 = arith.constant 0 : i32
    %c0_i32_0 = arith.constant 0 : i32
    return %arg0, %c0_i32 : i32, i32
  }
}

</mosaic_0001>

<llo_original>
// kernel: tpu_custom_call.1
$region0: #{tpu_custom_call.1}
  #allocation0 [shape = 'u32[]', space=smem, size = 0x4, offset = 0x4, fixed_abs, tag = 'smem constant byte address 0x4 - core index']
  #allocation1 [shape = 'u32[144,128]{1,0:T(1,128)}', space=vmem, size = 0x12000, scoped, tag = 'internal scratch']
  %s0 = inlined_call_operand.vmem [shape: f32[24,16], index: 0, kind: input, shape index: {}]
  %s1 = inlined_call_operand.vmem [shape: bf16[16,32], index: 1, kind: input, shape index: {}]
  %s2 = inlined_call_operand.vmem [shape: f32[1,32], index: 2, kind: input, shape index: {}]
  %s3 = inlined_call_operand.vmem [shape: bf16[32,64], index: 3, kind: input, shape index: {}]
  %s4 = inlined_call_operand.vmem [shape: f32[1,64], index: 4, kind: input, shape index: {}]
  %s5 = inlined_call_operand.vmem [shape: bf16[64,128], index: 5, kind: input, shape index: {}]
  %s6 = inlined_call_operand.vmem [shape: f32[1,128], index: 6, kind: input, shape index: {}]
  %s7 = inlined_call_operand.hbm [shape: f32[24,128], index: 7, kind: output, shape index: {}]
  %s8 = sld [smem:[#allocation0]]
  $region61: #{tpu_custom_call.1} parent=0
    _
  %s10 = ssub.s32 1, %s8
  %s11 = scalar_select 0, %s10, %s8
  $region1: #{tpu_custom_call.1} parent=0
    #allocation2 [shape = 'u8[16384]{0}', space=vmem, size = 0x4000, scoped, tag = 'output window, operand 0']
    #allocation3 [shape = 's32[2]{0}', space=sflag, size = 0x8, scoped, tag = 'scoped memory for tpu_custom_call.1']
    %12 = vsyncpa [#allocation3], 0
    %s13 = scalar_lea.sflag [#allocation3], 1
    %14 = vsyncpa %s13, 0
    loop: start=0, step=1, limit=4
    $region2: #{tpu_custom_call.1} parent=1 // loop_pre_header
      _
    $region3: #{tpu_custom_call.1} parent=1 // loop_header
      %s16 = sphi 0, %s20
      %p17 = scmp.ge.s32.totalorder %s16, 4
      %s26 = sphi 0, %s28
      %s29 = sphi 0, %s26
      %s30 = sphi 0, %s29
      %s46 = sphi 0, %s30
      %s50 = sphi 0, %s50
      %s52 = sphi 0, %s50
      %s53 = sphi 0, %s52
      %s67 = sphi 0, %s53
      %s71 = sphi 0, %s71
      %s73 = sphi 0, %s71
      %s74 = sphi 0, %s73
      %s88 = sphi 0, %s74
      %s92 = sphi 0, %s92
      %s94 = sphi 0, %s92
      %s95 = sphi 0, %s94
      %s109 = sphi 0, %s95
      %s113 = sphi 0, %s113
      %s115 = sphi 0, %s113
      %s116 = sphi 0, %s115
      %s130 = sphi 0, %s116
      %s134 = sphi 0, %s134
      %s136 = sphi 0, %s134
      %s137 = sphi 0, %s136
      %s151 = sphi 0, %s137
      %s155 = sphi 0, %s155
      %s157 = sphi 0, %s155
      %s158 = sphi 0, %s157
      %s172 = sphi 0, %s158
      %s178 = sphi 0, %s180
      %s181 = sphi 0, %s178
      %s182 = sphi 0, %s181
      %s198 = sphi 0, %s182
    $region4: #{tpu_custom_call.1} parent=1 // loop_header_branch
      %19 = sbr.rel (%p17) target = $region8
    $region5: #{tpu_custom_call.1} parent=1 // loop_body
      %s21 = ssub.s32 %s16, 1
      %s22 = ssub.s32 %s16, 2
      %s23 = sadd.s32 %s16, 1
      %s24 = ssub.s32 %s16, %s23
      %p25 = scmp.eq.s32.totalorder %s24, 0
      %s27 = sadd.s32 %s26, 1
      %s28 = scalar_select %p25, %s26, %s27
      %p31 = pneg %p25
      %p32 = scmp.eq.s32.totalorder %s16, 1
      %p33 = por %p31, %p32
      %p34 = scmp.ne.s32.totalorder %s26, %s29
      %p35 = scmp.eq.s32.totalorder %s16, 0
      %p36 = por %p34, %p35
      %p37 = scmp.ne.s32.totalorder %s26, %s29
      %p38 = scmp.eq.s32.totalorder %s21, 1
      %p39 = por %p37, %p38
      %p40 = scmp.ne.s32.totalorder %s29, %s30
      %p41 = scmp.eq.s32.totalorder %s21, 0
      %p42 = por %p40, %p41
      %p43 = scmp.ne.s32.totalorder %s29, %s30
      %p44 = scmp.eq.s32.totalorder %s22, 1
      %p45 = por %p43, %p44
      %p47 = scmp.ne.s32.totalorder %s30, %s46
      %p48 = scmp.eq.s32.totalorder %s22, 0
      %p49 = por %p47, %p48
      %s51 = sadd.s32 %s50, 1
      %p54 = scmp.eq.s32.totalorder %s16, 1
      %p55 = scmp.ne.s32.totalorder %s50, %s52
      %p56 = scmp.eq.s32.totalorder %s16, 0
      %p57 = por %p55, %p56
      %p58 = scmp.ne.s32.totalorder %s50, %s52
      %p59 = scmp.eq.s32.totalorder %s21, 1
      %p60 = por %p58, %p59
      %p61 = scmp.ne.s32.totalorder %s52, %s53
      %p62 = scmp.eq.s32.totalorder %s21, 0
      %p63 = por %p61, %p62
      %p64 = scmp.ne.s32.totalorder %s52, %s53
      %p65 = scmp.eq.s32.totalorder %s22, 1
      %p66 = por %p64, %p65
      %p68 = scmp.ne.s32.totalorder %s53, %s67
      %p69 = scmp.eq.s32.totalorder %s22, 0
      %p70 = por %p68, %p69
      %s72 = sadd.s32 %s71, 1
      %p75 = scmp.eq.s32.totalorder %s16, 1
      %p76 = scmp.ne.s32.totalorder %s71, %s73
      %p77 = scmp.eq.s32.totalorder %s16, 0
      %p78 = por %p76, %p77
      %p79 = scmp.ne.s32.totalorder %s71, %s73
      %p80 = scmp.eq.s32.totalorder %s21, 1
      %p81 = por %p79, %p80
      %p82 = scmp.ne.s32.totalorder %s73, %s74
      %p83 = scmp.eq.s32.totalorder %s21, 0
      %p84 = por %p82, %p83
      %p85 = scmp.ne.s32.totalorder %s73, %s74
      %p86 = scmp.eq.s32.totalorder %s22, 1
      %p87 = por %p85, %p86
      %p89 = scmp.ne.s32.totalorder %s74, %s88
      %p90 = scmp.eq.s32.totalorder %s22, 0
      %p91 = por %p89, %p90
      %s93 = sadd.s32 %s92, 1
      %p96 = scmp.eq.s32.totalorder %s16, 1
      %p97 = scmp.ne.s32.totalorder %s92, %s94
      %p98 = scmp.eq.s32.totalorder %s16, 0
      %p99 = por %p97, %p98
      %p100 = scmp.ne.s32.totalorder %s92, %s94
      %p101 = scmp.eq.s32.totalorder %s21, 1
      %p102 = por %p100, %p101
      %p103 = scmp.ne.s32.totalorder %s94, %s95
      %p104 = scmp.eq.s32.totalorder %s21, 0
      %p105 = por %p103, %p104
      %p106 = scmp.ne.s32.totalorder %s94, %s95
      %p107 = scmp.eq.s32.totalorder %s22, 1
      %p108 = por %p106, %p107
      %p110 = scmp.ne.s32.totalorder %s95, %s109
      %p111 = scmp.eq.s32.totalorder %s22, 0
      %p112 = por %p110, %p111
      %s114 = sadd.s32 %s113, 1
      %p117 = scmp.eq.s32.totalorder %s16, 1
      %p118 = scmp.ne.s32.totalorder %s113, %s115
      %p119 = scmp.eq.s32.totalorder %s16, 0
      %p120 = por %p118, %p119
      %p121 = scmp.ne.s32.totalorder %s113, %s115
      %p122 = scmp.eq.s32.totalorder %s21, 1
      %p123 = por %p121, %p122
      %p124 = scmp.ne.s32.totalorder %s115, %s116
      %p125 = scmp.eq.s32.totalorder %s21, 0
      %p126 = por %p124, %p125
      %p127 = scmp.ne.s32.totalorder %s115, %s116
      %p128 = scmp.eq.s32.totalorder %s22, 1
      %p129 = por %p127, %p128
      %p131 = scmp.ne.s32.totalorder %s116, %s130
      %p132 = scmp.eq.s32.totalorder %s22, 0
      %p133 = por %p131, %p132
      %s135 = sadd.s32 %s134, 1
      %p138 = scmp.eq.s32.totalorder %s16, 1
      %p139 = scmp.ne.s32.totalorder %s134, %s136
      %p140 = scmp.eq.s32.totalorder %s16, 0
      %p141 = por %p139, %p140
      %p142 = scmp.ne.s32.totalorder %s134, %s136
      %p143 = scmp.eq.s32.totalorder %s21, 1
      %p144 = por %p142, %p143
      %p145 = scmp.ne.s32.totalorder %s136, %s137
      %p146 = scmp.eq.s32.totalorder %s21, 0
      %p147 = por %p145, %p146
      %p148 = scmp.ne.s32.totalorder %s136, %s137
      %p149 = scmp.eq.s32.totalorder %s22, 1
      %p150 = por %p148, %p149
      %p152 = scmp.ne.s32.totalorder %s137, %s151
      %p153 = scmp.eq.s32.totalorder %s22, 0
      %p154 = por %p152, %p153
      %s156 = sadd.s32 %s155, 1
      %p159 = scmp.eq.s32.totalorder %s16, 1
      %p160 = scmp.ne.s32.totalorder %s155, %s157
      %p161 = scmp.eq.s32.totalorder %s16, 0
      %p162 = por %p160, %p161
      %p163 = scmp.ne.s32.totalorder %s155, %s157
      %p164 = scmp.eq.s32.totalorder %s21, 1
      %p165 = por %p163, %p164
      %p166 = scmp.ne.s32.totalorder %s157, %s158
      %p167 = scmp.eq.s32.totalorder %s21, 0
      %p168 = por %p166, %p167
      %p169 = scmp.ne.s32.totalorder %s157, %s158
      %p170 = scmp.eq.s32.totalorder %s22, 1
      %p171 = por %p169, %p170
      %p173 = scmp.ne.s32.totalorder %s158, %s172
      %p174 = scmp.eq.s32.totalorder %s22, 0
      %p175 = por %p173, %p174
      %s176 = ssub.s32 %s16, %s23
      %p177 = scmp.eq.s32.totalorder %s176, 0
      %s179 = sadd.s32 %s178, 1
      %s180 = scalar_select %p177, %s178, %s179
      %p183 = pneg %p177
      %p184 = scmp.eq.s32.totalorder %s16, 1
      %p185 = por %p183, %p184
      %p186 = scmp.ne.s32.totalorder %s178, %s181
      %p187 = scmp.eq.s32.totalorder %s16, 0
      %p188 = por %p186, %p187
      %p189 = scmp.ne.s32.totalorder %s178, %s181
      %p190 = scmp.eq.s32.totalorder %s21, 1
      %p191 = por %p189, %p190
      %p192 = scmp.ne.s32.totalorder %s181, %s182
      %p193 = scmp.eq.s32.totalorder %s21, 0
      %p194 = por %p192, %p193
      %p195 = scmp.ne.s32.totalorder %s181, %s182
      %p196 = scmp.eq.s32.totalorder %s22, 1
      %p197 = por %p195, %p196
      %p199 = scmp.ne.s32.totalorder %s182, %s198
      %p200 = scmp.eq.s32.totalorder %s22, 0
      %p201 = por %p199, %p200
      %p202 = scmp.le.s32.totalorder 1, %s16
      %p203 = scmp.lt.s32.totalorder %s16, 3
      %p204 = pnand %p202, %p203
      %p205 = pneg %p204
      // Predicated region
      $region9: #{tpu_custom_call.1} parent=5 // pred_check
        _
      $region10: #{tpu_custom_call.1} parent=5 // pred_check_branch
        %207 = sbr.rel (%p204) target = $region12
      $region11: #{tpu_custom_call.1} parent=5 // pred_region
        %s208 = ssub.s32 %s16, 1
        // Predicated region
        $region13: #{tpu_custom_call.1} parent=11 // pred_check
          %p209 = pneg %p63
        $region14: #{tpu_custom_call.1} parent=11 // pred_check_branch
          %211 = sbr.rel (%p209) target = $region16
        $region15: #{tpu_custom_call.1} parent=11 // pred_region
          _
        $region16: #{tpu_custom_call.1} parent=11 // pred_fallthru
          _
        // Predicated region
        $region17: #{tpu_custom_call.1} parent=11 // pred_check
          %p212 = pneg %p84
        $region18: #{tpu_custom_call.1} parent=11 // pred_check_branch
          %214 = sbr.rel (%p212) target = $region20
        $region19: #{tpu_custom_call.1} parent=11 // pred_region
          _
        $region20: #{tpu_custom_call.1} parent=11 // pred_fallthru
          _
        // Predicated region
        $region21: #{tpu_custom_call.1} parent=11 // pred_check
          %p215 = pneg %p105
        $region22: #{tpu_custom_call.1} parent=11 // pred_check_branch
          %217 = sbr.rel (%p215) target = $region24
        $region23: #{tpu_custom_call.1} parent=11 // pred_region
          _
        $region24: #{tpu_custom_call.1} parent=11 // pred_fallthru
          _
        // Predicated region
        $region25: #{tpu_custom_call.1} parent=11 // pred_check
          %p218 = pneg %p126
        $region26: #{tpu_custom_call.1} parent=11 // pred_check_branch
          %220 = sbr.rel (%p218) target = $region28
        $region27: #{tpu_custom_call.1} parent=11 // pred_region
          _
        $region28: #{tpu_custom_call.1} parent=11 // pred_fallthru
          _
        // Predicated region
        $region29: #{tpu_custom_call.1} parent=11 // pred_check
          %p221 = pneg %p147
        $region30: #{tpu_custom_call.1} parent=11 // pred_check_branch
          %223 = sbr.rel (%p221) target = $region32
        $region31: #{tpu_custom_call.1} parent=11 // pred_region
          _
        $region32: #{tpu_custom_call.1} parent=11 // pred_fallthru
          _
        // Predicated region
        $region33: #{tpu_custom_call.1} parent=11 // pred_check
          %p224 = pneg %p168
        $region34: #{tpu_custom_call.1} parent=11 // pred_check_branch
          %226 = sbr.rel (%p224) target = $region36
        $region35: #{tpu_custom_call.1} parent=11 // pred_region
          _
        $region36: #{tpu_custom_call.1} parent=11 // pred_fallthru
          _
      $region12: #{tpu_custom_call.1} parent=5 // pred_fallthru
        _
      %p227 = scmp.lt.s32.totalorder %s16, 2
      // Predicated region
      $region37: #{tpu_custom_call.1} parent=5 // pred_check
        %p228 = pneg %p227
      $region38: #{tpu_custom_call.1} parent=5 // pred_check_branch
        %230 = sbr.rel (%p228) target = $region40
      $region39: #{tpu_custom_call.1} parent=5 // pred_region
        // Predicated region
        $region41: #{tpu_custom_call.1} parent=39 // pred_check
          %p231 = pneg %p36
        $region42: #{tpu_custom_call.1} parent=39 // pred_check_branch
          %233 = sbr.rel (%p231) target = $region44
        $region43: #{tpu_custom_call.1} parent=39 // pred_region
          %s234 = smul.u32 2, %s16
          %s235 = ssub.s32 3, %s234
          %p236 = scmp.lt.s32.totalorder %s235, 2
          %s237 = scalar_select %p236, %s235, 2
          %s238 = smul.u32 128, %s237
          %p239 = scmp.lt.s32.totalorder %s234, 2
          %s240 = scalar_select %p239, %s234, 2
          %s241 = smul.addr %s240, 8
          %s242 = scalar_lea.vmem %s0, %s241
          %s243 = smul.u32 2, %s16
          %s244 = ssub.s32 3, %s243
          %p245 = scmp.lt.s32.totalorder %s244, 2
          %s246 = scalar_select %p245, %s244, 2
          %s247 = smul.u32 128, %s246
        $region44: #{tpu_custom_call.1} parent=39 // pred_fallthru
          _
      $region40: #{tpu_custom_call.1} parent=5 // pred_fallthru
        _
      %p248 = scmp.le.s32.totalorder 1, %s16
      %p249 = scmp.lt.s32.totalorder %s16, 3
      %p250 = pnand %p248, %p249
      %p251 = pneg %p250
      // Predicated region
      $region45: #{tpu_custom_call.1} parent=5 // pred_check
        _
      $region46: #{tpu_custom_call.1} parent=5 // pred_check_branch
        %253 = sbr.rel (%p250) target = $region48
      $region47: #{tpu_custom_call.1} parent=5 // pred_region
        %s254 = ssub.s32 %s16, 1
        %s255 = smul.u32 2, %s21
        %s256 = ssub.s32 3, %s255
        %p257 = scmp.lt.s32.totalorder %s256, 2
        %s258 = scalar_select %p257, %s256, 2
        %s259 = smul.u32 128, %s258
        %p260 = scmp.lt.s32.totalorder %s255, 2
        %s261 = scalar_select %p260, %s255, 2
        %s262 = smul.addr %s261, 8
        %s263 = scalar_lea.vmem %s0, %s262
        %p264 = pneg %p42
        %p265 = pneg %p39
        %p266 = pneg %p63
        %p267 = pneg %p60
        %p268 = pneg %p84
        %p269 = pneg %p81
        %p270 = pneg %p105
        %p271 = pneg %p102
        %p272 = pneg %p126
        %p273 = pneg %p123
        %p274 = pneg %p147
        %p275 = pneg %p144
        %p276 = pneg %p168
        %p277 = pneg %p165
        %p278 = pneg %p194
        %p279 = pneg %p191
        %s280 = sand.u32 %s181, 1
        %s281 = scalar_lea.sflag [#allocation3], %s280
        %s282 = sand.u32 %s181, 1
        %s283 = smul.addr %s282, 16
        %s284 = scalar_lea.vmem [#allocation2], %s283
        %s285 = smul.u32 2, %s21
        %s286 = ssub.s32 3, %s285
        %p287 = scmp.lt.s32.totalorder %s286, 2
        %s288 = scalar_select %p287, %s286, 2
        %s289 = smul.u32 128, %s288
        %p290 = scmp.lt.s32.totalorder %s285, 2
        %s291 = scalar_select %p290, %s285, 2
        %s292 = smul.addr %s291, 8
        %s293 = scalar_lea.vmem %s0, %s292
        %s294 = smul.u32 2, %s21
        %s295 = ssub.s32 3, %s294
        %p296 = scmp.lt.s32.totalorder %s295, 2
        %s297 = scalar_select %p296, %s295, 2
        %s298 = smul.u32 128, %s297
        %s299 = smul.u32 2, %s21
        %s300 = ssub.s32 3, %s299
        %p301 = scmp.lt.s32.totalorder %s300, 2
        %s302 = scalar_select %p301, %s300, 2
        %s303 = smul.u32 128, %s302
        %v305 = vld [vmem:[%s293] sm:$0xff]
        %v306 = vld [vmem:[%s293 + $0x8] sm:$0xff]
        %v307 = vld [vmem:[%s1] sm:$0xf]
        %v308 = vld [vmem:[%s1 + $0x4] sm:$0xf]
        %v309 = vld [vmem:[%s2] sm:$0x1]
        %v310 = vpack.c.bf16 %v306, %v305
        %v312 = vlaneseq
        %v313 = vshrl.u32 %v312, 7
        %v314 = vsub.s32 0, %v313
        %v315 = vrot.slane %v309, %v314
        %v319 = vunpack.c.l.b16 %v307
        %v320 = vunpack.c.l.b16 %v308
        %v321 = vpack.c.b16 %v320, %v319
        %vm323 = vcmask 130048
        %v325 = vsel %vm323, %v310, 0
        %327 = vmatprep.subr.bf16.mxu0 0
        %328 = vmatpush1.bf16.msra.mxu0 %v321
        %329 = vmatprep.subr.bf16.mxu0 0
        %330 = vmatpush1.bf16.msra.mxu0 0
        %331 = vmatprep.subr.bf16.mxu0 0
        %332 = vmatpush1.bf16.msra.mxu0 0
        %333 = vmatprep.subr.bf16.mxu0 0
        %334 = vmatpush1.bf16.msra.mxu0 0
        %335 = vmatprep.subr.bf16.mxu0 0
        %336 = vmatpush1.bf16.msra.mxu0 0
        %337 = vmatprep.subr.bf16.mxu0 0
        %338 = vmatpush1.bf16.msra.mxu0 0
        %339 = vmatprep.subr.bf16.mxu0 0
        %340 = vmatpush1.bf16.msra.mxu0 0
        %341 = vmatprep.subr.bf16.mxu0 0
        %342 = vmatpush1.bf16.msra.mxu0 0
        %343 = vmatprep.subr.bf16.mxu0 0
        %344 = vmatpush1.bf16.msra.mxu0 0
        %345 = vmatprep.subr.bf16.mxu0 0
        %346 = vmatpush1.bf16.msra.mxu0 0
        %347 = vmatprep.subr.bf16.mxu0 0
        %348 = vmatpush1.bf16.msra.mxu0 0
        %349 = vmatprep.subr.bf16.mxu0 0
        %350 = vmatpush1.bf16.msra.mxu0 0
        %351 = vmatprep.subr.bf16.mxu0 0
        %352 = vmatpush1.bf16.msra.mxu0 0
        %353 = vmatprep.subr.bf16.mxu0 0
        %354 = vmatpush1.bf16.msra.mxu0 0
        %355 = vmatprep.subr.bf16.mxu0 0
        %356 = vmatpush1.bf16.msra.mxu0 0
        %357 = vmatprep.subr.bf16.mxu0 0
        %358 = vmatpush1.bf16.msra.mxu0 0
        %359 = vmatprep.mubr.bf16.mxu0 0
        %360 = vmatmul.mubr.bf16.gmra.mrb[0].mxu0 %v325
        %v361 = vpop.f32.mrb[0].mxu0
        %v362 = vadd.f32 %v315, %v361
        %v363 = vpop.f32.mrb[0].mxu0
        %v364 = vpop.f32.mrb[0].mxu0
        %v365 = vadd.f32 %v315, %v364
        %v366 = vpop.f32.mrb[0].mxu0
        %367 = vdwg.mxu0
        %v368 = vmax.f32 %v362, 0.0
        %v369 = vmax.f32 %v365, 0.0
        %v370 = vld [vmem:[%s3] sm:$0xf]
        %v371 = vld [vmem:[%s3 + $0x4] sm:$0xf]
        %v372 = vld [vmem:[%s3 + $0x8] sm:$0xf]
        %v373 = vld [vmem:[%s3 + $0xc] sm:$0xf]
        %v374 = vld [vmem:[%s4] sm:$0x1]
        %v375 = vpack.c.bf16 %v369, %v368
        %v377 = vlaneseq
        %v378 = vshrl.u32 %v377, 7
        %v379 = vsub.s32 0, %v378
        %v380 = vrot.slane %v374, %v379
        %v386 = vunpack.c.l.b16 %v370
        %v387 = vunpack.c.l.b16 %v371
        %v388 = vunpack.c.l.b16 %v372
        %v389 = vunpack.c.l.b16 %v373
        %v390 = vpack.c.b16 %v387, %v386
        %v391 = vpack.c.b16 %v389, %v388
        %vm394 = vcmask 261120
        %v396 = vsel %vm394, %v375, 0
        %398 = vmatprep.subr.bf16.mxu0 0
        %399 = vmatpush1.bf16.msra.mxu0 %v390
        %400 = vmatprep.subr.bf16.mxu0 0
        %401 = vmatpush1.bf16.msra.mxu0 %v391
        %402 = vmatprep.subr.bf16.mxu0 0
        %403 = vmatpush1.bf16.msra.mxu0 0
        %404 = vmatprep.subr.bf16.mxu0 0
        %405 = vmatpush1.bf16.msra.mxu0 0
        %406 = vmatprep.subr.bf16.mxu0 0
        %407 = vmatpush1.bf16.msra.mxu0 0
        %408 = vmatprep.subr.bf16.mxu0 0
        %409 = vmatpush1.bf16.msra.mxu0 0
        %410 = vmatprep.subr.bf16.mxu0 0
        %411 = vmatpush1.bf16.msra.mxu0 0
        %412 = vmatprep.subr.bf16.mxu0 0
        %413 = vmatpush1.bf16.msra.mxu0 0
        %414 = vmatprep.subr.bf16.mxu0 0
        %415 = vmatpush1.bf16.msra.mxu0 0
        %416 = vmatprep.subr.bf16.mxu0 0
        %417 = vmatpush1.bf16.msra.mxu0 0
        %418 = vmatprep.subr.bf16.mxu0 0
        %419 = vmatpush1.bf16.msra.mxu0 0
        %420 = vmatprep.subr.bf16.mxu0 0
        %421 = vmatpush1.bf16.msra.mxu0 0
        %422 = vmatprep.subr.bf16.mxu0 0
        %423 = vmatpush1.bf16.msra.mxu0 0
        %424 = vmatprep.subr.bf16.mxu0 0
        %425 = vmatpush1.bf16.msra.mxu0 0
        %426 = vmatprep.subr.bf16.mxu0 0
        %427 = vmatpush1.bf16.msra.mxu0 0
        %428 = vmatprep.subr.bf16.mxu0 0
        %429 = vmatpush1.bf16.msra.mxu0 0
        %430 = vmatprep.mubr.bf16.mxu0 0
        %431 = vmatmul.mubr.bf16.gmra.mrb[0].mxu0 %v396
        %v432 = vpop.f32.mrb[0].mxu0
        %v433 = vadd.f32 %v380, %v432
        %v434 = vpop.f32.mrb[0].mxu0
        %v435 = vpop.f32.mrb[0].mxu0
        %v436 = vadd.f32 %v380, %v435
        %v437 = vpop.f32.mrb[0].mxu0
        %438 = vdwg.mxu0
        %v439 = vmax.f32 %v433, 0.0
        %v440 = vmax.f32 %v436, 0.0
        %v441 = vld [vmem:[%s5] sm:$0xf]
        %v442 = vld [vmem:[%s5 + $0x4] sm:$0xf]
        %v443 = vld [vmem:[%s5 + $0x8] sm:$0xf]
        %v444 = vld [vmem:[%s5 + $0xc] sm:$0xf]
        %v445 = vld [vmem:[%s5 + $0x10] sm:$0xf]
        %v446 = vld [vmem:[%s5 + $0x14] sm:$0xf]
        %v447 = vld [vmem:[%s5 + $0x18] sm:$0xf]
        %v448 = vld [vmem:[%s5 + $0x1c] sm:$0xf]
        %v449 = vld [vmem:[%s6] sm:$0x1]
        %v450 = vpack.c.bf16 %v440, %v439
        %v452 = vlaneseq
        %v453 = vshrl.u32 %v452, 7
        %v454 = vsub.s32 0, %v453
        %v455 = vrot.slane %v449, %v454
        %v465 = vunpack.c.l.b16 %v441
        %v466 = vunpack.c.l.b16 %v442
        %v467 = vunpack.c.l.b16 %v443
        %v468 = vunpack.c.l.b16 %v444
        %v469 = vunpack.c.l.b16 %v445
        %v470 = vunpack.c.l.b16 %v446
        %v471 = vunpack.c.l.b16 %v447
        %v472 = vunpack.c.l.b16 %v448
        %v473 = vpack.c.b16 %v466, %v465
        %v474 = vpack.c.b16 %v468, %v467
        %v475 = vpack.c.b16 %v470, %v469
        %v476 = vpack.c.b16 %v472, %v471
        %vm481 = vcmask 523264
        %v483 = vsel %vm481, %v450, 0
        %485 = vmatprep.subr.bf16.mxu0 0
        %486 = vmatpush1.bf16.msra.mxu0 %v473
        %487 = vmatprep.subr.bf16.mxu0 0
        %488 = vmatpush1.bf16.msra.mxu0 %v474
        %489 = vmatprep.subr.bf16.mxu0 0
        %490 = vmatpush1.bf16.msra.mxu0 %v475
        %491 = vmatprep.subr.bf16.mxu0 0
        %492 = vmatpush1.bf16.msra.mxu0 %v476
        %493 = vmatprep.subr.bf16.mxu0 0
        %494 = vmatpush1.bf16.msra.mxu0 0
        %495 = vmatprep.subr.bf16.mxu0 0
        %496 = vmatpush1.bf16.msra.mxu0 0
        %497 = vmatprep.subr.bf16.mxu0 0
        %498 = vmatpush1.bf16.msra.mxu0 0
        %499 = vmatprep.subr.bf16.mxu0 0
        %500 = vmatpush1.bf16.msra.mxu0 0
        %501 = vmatprep.subr.bf16.mxu0 0
        %502 = vmatpush1.bf16.msra.mxu0 0
        %503 = vmatprep.subr.bf16.mxu0 0
        %504 = vmatpush1.bf16.msra.mxu0 0
        %505 = vmatprep.subr.bf16.mxu0 0
        %506 = vmatpush1.bf16.msra.mxu0 0
        %507 = vmatprep.subr.bf16.mxu0 0
        %508 = vmatpush1.bf16.msra.mxu0 0
        %509 = vmatprep.subr.bf16.mxu0 0
        %510 = vmatpush1.bf16.msra.mxu0 0
        %511 = vmatprep.subr.bf16.mxu0 0
        %512 = vmatpush1.bf16.msra.mxu0 0
        %513 = vmatprep.subr.bf16.mxu0 0
        %514 = vmatpush1.bf16.msra.mxu0 0
        %515 = vmatprep.subr.bf16.mxu0 0
        %516 = vmatpush1.bf16.msra.mxu0 0
        %517 = vmatprep.mubr.bf16.mxu0 0
        %518 = vmatmul.mubr.bf16.gmra.mrb[0].mxu0 %v483
        %v519 = vpop.f32.mrb[0].mxu0
        %v520 = vadd.f32 %v455, %v519
        %v521 = vpop.f32.mrb[0].mxu0
        %v522 = vpop.f32.mrb[0].mxu0
        %v523 = vadd.f32 %v455, %v522
        %v524 = vpop.f32.mrb[0].mxu0
        %525 = vdwg.mxu0
        %v526 = vsub.f32 0.0, %v520
        %v527 = vsub.f32 0.0, %v523
        %v528 = vmul.f32 %v526, 1.442695
        %v529 = vpow.pop %v528
        %v530 = vmul.f32 %v527, 1.442695
        %v531 = vpow.pop %v530
        %v532 = vadd.f32 %v529, 1.0
        %v533 = vadd.f32 %v531, 1.0
        %v534 = vrcp.pop %v532
        %v535 = vrcp.pop %v533
        %536 = vst [vmem:[%s284] sm:$0xff] %v534
        %537 = vst [vmem:[%s284 + $0x8] sm:$0xff] %v535
        %s538 = sand.u32 %s181, 1
        %s539 = scalar_lea.sflag [#allocation3], %s538
        %s540 = sand.u32 %s181, 1
        %s541 = smul.addr %s540, 16
        %s542 = scalar_lea.vmem [#allocation2], %s541
        // Predicated region
        $region49: #{tpu_custom_call.1} parent=47 // pred_check
          %p543 = pneg %p191
        $region50: #{tpu_custom_call.1} parent=47 // pred_check_branch
          %545 = sbr.rel (%p543) target = $region52
        $region51: #{tpu_custom_call.1} parent=47 // pred_region
          %s546 = smul.u32 2, %s21
          %s547 = ssub.s32 3, %s546
          %p548 = scmp.lt.s32.totalorder %s547, 2
          %s549 = scalar_select %p548, %s547, 2
          %s550 = smul.u32 128, %s549
          %s552 = ssub.s32 256, %s550
          %553 = vsyncadd %s539, %s552
          %p554 = scmp.ne.s32.totalorder 0, %s550
          %s555 = smul.addr %s546, 128
          %s556 = scalar_lea.hbm %s7, %s555
          %s557 = smul.u32 8, %s549
          %s558 = sshll.u32 %s542, 4
          %s559 = int_to_ptr.vmem [resolvable:$true] %s558
          %s560 = sshll.u32 %s557, 4
          %564 = dma.vmem_to_hbm [thread:$0]  (%p554), %s559, %s560, %s556, %s539, 128, 128, 8
        $region52: #{tpu_custom_call.1} parent=47 // pred_fallthru
          _
      $region48: #{tpu_custom_call.1} parent=5 // pred_fallthru
        _
      %p565 = scmp.le.s32.totalorder 2, %s16
      // Predicated region
      $region53: #{tpu_custom_call.1} parent=5 // pred_check
        %p566 = pneg %p565
      $region54: #{tpu_custom_call.1} parent=5 // pred_check_branch
        %568 = sbr.rel (%p566) target = $region56
      $region55: #{tpu_custom_call.1} parent=5 // pred_region
        %s569 = ssub.s32 %s16, 2
        // Predicated region
        $region57: #{tpu_custom_call.1} parent=55 // pred_check
          %p570 = pneg %p197
        $region58: #{tpu_custom_call.1} parent=55 // pred_check_branch
          %572 = sbr.rel (%p570) target = $region60
        $region59: #{tpu_custom_call.1} parent=55 // pred_region
          %s573 = sand.u32 %s182, 1
          %s574 = scalar_lea.sflag [#allocation3], %s573
          %s575 = sand.u32 %s182, 1
          %s576 = smul.addr %s575, 16
          %s577 = scalar_lea.vmem [#allocation2], %s576
          %578 = dma.done %s574, 256
        $region60: #{tpu_custom_call.1} parent=55 // pred_fallthru
          _
      $region56: #{tpu_custom_call.1} parent=5 // pred_fallthru
        _
    $region6: #{tpu_custom_call.1} parent=1 // loop_footer
      %s20 = sadd.s32 1, %s16
    $region7: #{tpu_custom_call.1} parent=1 // loop_footer_branch
      %15 = sbr.rel target = $region3
    $region8: #{tpu_custom_call.1} parent=1 // loop_exit
      _
    %579 = vsyncpa [#allocation3], 1
    %s580 = scalar_lea.sflag [#allocation3], 1
    %581 = vsyncpa %s580, 1

</llo_original>
